<compile_context>
chip_gen: v7x
topology: tpu7x:2x2x1
jax: 0.10.0
libtpu: 0.0.40
codegen_flags: <defaults>
</compile_context>

<pallas_src>
import jax
import jax.numpy as jnp
from jax.experimental import pallas as pl
from jax.experimental.pallas import tpu as pltpu


def _linear_kernel(x_ref, w_ref, b_ref, o_ref):
    # Cast x to the (prepared) weight dtype in VMEM -> bf16 MXU inputs without
    # a wrapper-side HBM cast; f32 accumulation on the MXU; bias add on VPU.
    a = x_ref[...].astype(w_ref.dtype)
    acc = jnp.dot(a, w_ref[...], preferred_element_type=jnp.float32)
    o_ref[...] = (acc + b_ref[...].astype(jnp.float32)).astype(o_ref.dtype)


def _pick_tile(dim, cap, quantum):
    """Largest legal tile <= cap: either the full dim or a multiple of quantum."""
    if dim <= cap:
        return dim  # full-dim block is always legal under the (8,128) rule
    return max((cap // quantum) * quantum, quantum)


def _vmem_budget():
    """~75% of physical VMEM (48 MiB on v7x, 96 MiB on v5e/v6e)."""
    try:
        cap = pltpu.get_tpu_info().vmem_capacity_bytes
    except Exception:
        cap = 64 << 20  # conservative (v7x) fallback
    return int(0.75 * cap)


def prepare_decoder_params(weight, bias, *, param_dtype=jnp.float32):
    """One-time prep (hoisted out of the forward path).

    weight: (F, L) PyTorch nn.Linear layout  ->  (L, F) in param_dtype
    bias:   (F,)                             ->  (1, F) float32
    """
    F, _ = weight.shape
    w_t = jnp.asarray(weight).T.astype(param_dtype)
    b_row = jnp.asarray(bias).reshape(1, F).astype(jnp.float32)
    return w_t, b_row


def linear_decoder(x, w_t, b_row, *, out_dtype=None,
                   tm_cap=512, tn_cap=2048,
                   small_bytes_threshold=1 << 20):
    """Pallas LinearDecoder forward.

    x:     (B, L)  activations (any float dtype; read as-is)
    w_t:   (L, F)  prepared weight (see prepare_decoder_params)
    b_row: (1, F)  prepared bias, float32
    returns (B, F) = x @ w_t + b_row
    """
    B, L = x.shape
    Lw, F = w_t.shape
    assert L == Lw and b_row.shape == (1, F)
    if out_dtype is None:
        out_dtype = x.dtype  # numerics-parity default; bf16 is opt-in
    out_elt = jnp.dtype(out_dtype).itemsize

    # Small-size fast path: at these sizes the Pallas call is pure launch/step
    # overhead, a fused XLA dot + bias is strictly better.
    if B * F * out_elt < small_bytes_threshold:
        acc = jnp.dot(x.astype(w_t.dtype), w_t,
                      preferred_element_type=jnp.float32)
        return (acc + b_row).astype(out_dtype)

    tm = _pick_tile(B, tm_cap, 8)       # sublane quantum
    tn = _pick_tile(F, tn_cap, 128)     # lane quantum -> lane-dense output tiles
    gb, gf = pl.cdiv(B, tm), pl.cdiv(F, tn)

    # Put the larger grid axis outermost so (a) a >=2-extent axis is available
    # for megacore sharding on v7x and (b) when F-tiles dominate, the weight
    # column tile stays resident while x row tiles stream past it.
    if gb >= gf:
        grid = (gb, gf)
        x_map = lambda i, j: (i, 0)
        w_map = lambda i, j: (0, j)
        b_map = lambda i, j: (0, j)
        o_map = lambda i, j: (i, j)
    else:
        grid = (gf, gb)
        x_map = lambda j, i: (i, 0)
        w_map = lambda j, i: (0, j)
        b_map = lambda j, i: (0, j)
        o_map = lambda j, i: (i, j)

    # Double-buffered VMEM footprint of one grid step (+ headroom), capped per
    # chip generation (~48 MiB v7x, ~96 MiB v5e/v6e).
    x_elt = jnp.dtype(x.dtype).itemsize
    w_elt = jnp.dtype(w_t.dtype).itemsize
    block_bytes = 2 * (tm * L * x_elt + L * tn * w_elt + tn * 4
                       + tm * tn * out_elt)
    vmem_limit = int(min(max(4 * block_bytes, 32 << 20), _vmem_budget()))

    cost = pl.CostEstimate(
        flops=2 * B * L * F,
        transcendentals=0,
        bytes_accessed=(x.size * x_elt + w_t.size * w_elt + b_row.size * 4
                        + B * F * out_elt),
    )

    return pl.pallas_call(
        _linear_kernel,
        out_shape=jax.ShapeDtypeStruct((B, F), out_dtype),
        grid_spec=pltpu.PrefetchScalarGridSpec(
            num_scalar_prefetch=0,
            grid=grid,
            in_specs=[
                pl.BlockSpec((tm, L), x_map),   # x row-tile (native dtype)
                pl.BlockSpec((L, tn), w_map),   # weight col-tile (param dtype)
                pl.BlockSpec((1, tn), b_map),   # bias col-tile
            ],
            out_specs=pl.BlockSpec((tm, tn), o_map),
        ),
        compiler_params=pltpu.CompilerParams(
            dimension_semantics=("parallel", "parallel"),
            vmem_limit_bytes=vmem_limit,
            allow_input_fusion=[True, True, True],
        ),
        cost_estimate=cost,
    )(x, w_t, b_row)


if __name__ == "__main__":
    # Small shapes consistent with the module: batch=8, latent=32, feature=128.
    batch, latent_dimensions, feature_size = 8, 32, 128

    key = jax.random.PRNGKey(0)
    kx, kw, kb = jax.random.split(key, 3)

    # Deterministic params mimicking torch.nn.Linear init (uniform +-1/sqrt(in)).
    bound = 1.0 / jnp.sqrt(jnp.float32(latent_dimensions))
    weight = jax.random.uniform(
        kw, (feature_size, latent_dimensions), jnp.float32, -bound, bound
    )  # PyTorch layout (F, L)
    bias = jax.random.uniform(kb, (feature_size,), jnp.float32, -bound, bound)
    x = jax.random.normal(kx, (batch, latent_dimensions), jnp.float32)

    # Plain-JAX reference (same semantics as torch.nn.Linear).
    ref = x @ weight.T + bias

    # One-time parameter prep (hoisted out of the forward path).
    w_f32, b_row = prepare_decoder_params(weight, bias, param_dtype=jnp.float32)
    w_bf16, _ = prepare_decoder_params(weight, bias, param_dtype=jnp.bfloat16)

    # Pallas path, f32 params / f32 output: tight numerical parity check.
    out_f32 = jax.block_until_ready(
        linear_decoder(x, w_f32, b_row, out_dtype=jnp.float32,
                       small_bytes_threshold=0))
    assert out_f32.shape == (batch, feature_size)
    assert jnp.allclose(out_f32, ref, atol=1e-5, rtol=1e-5)

    # Pallas path, bf16 params + bf16 output (memory-optimized, opt-in).
    out_bf16 = jax.block_until_ready(
        linear_decoder(x, w_bf16, b_row, out_dtype=jnp.bfloat16,
                       small_bytes_threshold=0))
    assert out_bf16.shape == (batch, feature_size)
    assert jnp.allclose(out_bf16.astype(jnp.float32), ref, atol=5e-2, rtol=5e-2)

    # Default dispatch at these tiny shapes hits the XLA fast path.
    out_fast = jax.block_until_ready(linear_decoder(x, w_f32, b_row))
    assert jnp.allclose(out_fast, ref, atol=1e-5, rtol=1e-5)

    print("KERNEL_OK")
</pallas_src>

<mosaic_0001>
module attributes {stable_mosaic.version = 11 : i64} {
  func.func @_linear_kernel(%arg0: i32, %arg1: i32, %arg2: memref<8x32xf32, #tpu.memory_space<vmem>>, %arg3: memref<32x128xf32, #tpu.memory_space<vmem>>, %arg4: memref<1x128xf32, #tpu.memory_space<vmem>>, %arg5: memref<8x128xf32, #tpu.memory_space<vmem>>) attributes {dimension_semantics = [#tpu.dimension_semantics<parallel>, #tpu.dimension_semantics<parallel>], iteration_bounds = array<i64: 1, 1>, scalar_prefetch = 0 : i64, scratch_operands = 0 : i64, tpu.core_type = #tpu.core_type<tc>, window_params = [{transform_indices = @transform_0, window_bounds = array<i64: 8, 32>}, {transform_indices = @transform_1, window_bounds = array<i64: 32, 128>}, {transform_indices = @transform_2, window_bounds = array<i64: 1, 128>}, {transform_indices = @transform_3, window_bounds = array<i64: 8, 128>}]} {
    %c0 = arith.constant 0 : index
    %c0_0 = arith.constant 0 : index
    %0 = vector.load %arg2[%c0, %c0_0] : memref<8x32xf32, #tpu.memory_space<vmem>>, vector<8x32xf32>
    %c0_1 = arith.constant 0 : index
    %c0_2 = arith.constant 0 : index
    %1 = vector.load %arg3[%c0_1, %c0_2] : memref<32x128xf32, #tpu.memory_space<vmem>>, vector<32x128xf32>
    %cst = arith.constant dense<0.000000e+00> : vector<8x128xf32>
    %2 = tpu.matmul %0, %1, %cst {dimension_numbers = #tpu.dot_dimension_numbers<[1], [0], [0], [1], [0, 0, 1, 1], [], []>} : vector<8x32xf32>, vector<32x128xf32>, vector<8x128xf32> -> vector<8x128xf32>
    %c0_3 = arith.constant 0 : index
    %c0_4 = arith.constant 0 : index
    %3 = vector.load %arg4[%c0_3, %c0_4] : memref<1x128xf32, #tpu.memory_space<vmem>>, vector<1x128xf32>
    %4 = vector.broadcast %3 : vector<1x128xf32> to vector<8x128xf32>
    %5 = arith.addf %2, %4 : vector<8x128xf32>
    %c0_5 = arith.constant 0 : index
    %c0_6 = arith.constant 0 : index
    %6 = vector.load %arg5[%c0_5, %c0_6] : memref<8x128xf32, #tpu.memory_space<vmem>>, vector<8x128xf32>
    tpu.vector_store %arg5[%c0_5, %c0_6], %5 {strides = array<i32>} : memref<8x128xf32, #tpu.memory_space<vmem>>, vector<8x128xf32>,
    return
  }
  func.func @transform_0(%arg0: i32, %arg1: i32) -> (i32, i32) {
    %c0_i32 = arith.constant 0 : i32
    %c0_i32_0 = arith.constant 0 : i32
    return %arg0, %c0_i32 : i32, i32
  }
  func.func @transform_1(%arg0: i32, %arg1: i32) -> (i32, i32) {
    %c0_i32 = arith.constant 0 : i32
    %c0_i32_0 = arith.constant 0 : i32
    return %c0_i32, %arg1 : i32, i32
  }
  func.func @transform_2(%arg0: i32, %arg1: i32) -> (i32, i32) {
    %c0_i32 = arith.constant 0 : i32
    %c0_i32_0 = arith.constant 0 : i32
    return %c0_i32, %arg1 : i32, i32
  }
  func.func @transform_3(%arg0: i32, %arg1: i32) -> (i32, i32) {
    %c0_i32 = arith.constant 0 : i32
    return %arg0, %arg1 : i32, i32
  }
}

</mosaic_0001>

<llo_original>
// kernel: tpu_custom_call.1
$region0: #{tpu_custom_call.1}
  #allocation0 [shape = 'u32[]', space=smem, size = 0x4, offset = 0x4, fixed_abs, tag = 'smem constant byte address 0x4 - core index']
  #allocation1 [shape = 'u32[144,128]{1,0:T(1,128)}', space=vmem, size = 0x12000, scoped, tag = 'internal scratch']
  %s0 = inlined_call_operand.hbm [shape: f32[8,32], index: 0, kind: input, shape index: {}]
  %s1 = inlined_call_operand.hbm [shape: f32[32,128], index: 1, kind: input, shape index: {}]
  %s2 = inlined_call_operand.vmem [shape: f32[1,128], index: 2, kind: input, shape index: {}]
  %s3 = inlined_call_operand.hbm [shape: f32[8,128], index: 3, kind: output, shape index: {}]
  %s4 = sld [smem:[#allocation0]]
  $region30: #{tpu_custom_call.1} parent=0
    _
  %s6 = ssub.s32 1, %s4
  %s7 = scalar_select 0, %s6, %s4
  $region1: #{tpu_custom_call.1} parent=0
    #allocation2 [shape = 'u8[4096]{0}', space=vmem, size = 0x1000, scoped, tag = 'input window, operand 0, single buffered']
    #allocation3 [shape = 's32[1]{0}', space=sflag, size = 0x4, scoped, tag = 'scoped memory for tpu_custom_call.1']
    #allocation4 [shape = 's32[1]{0}', space=sflag, size = 0x4, scoped, tag = 'scoped memory for tpu_custom_call.1']
    #allocation5 [shape = 'u8[16384]{0}', space=vmem, size = 0x4000, scoped, tag = 'input window, operand 1, single buffered']
    #allocation6 [shape = 's32[1]{0}', space=sflag, size = 0x4, scoped, tag = 'scoped memory for tpu_custom_call.1']
    #allocation7 [shape = 'u8[4096]{0}', space=vmem, size = 0x1000, scoped, tag = 'output window, operand 0, single buffered']
    %8 = vsyncpa [#allocation3], 0
    %9 = vsyncpa [#allocation6], 0
    %10 = vsyncpa [#allocation4], 0
    // Predicated region
    $region2: #{tpu_custom_call.1} parent=1 // pred_check
      _
    $region3: #{tpu_custom_call.1} parent=1 // pred_check_branch
      %12 = sbr.rel (0) target = $region5
    $region4: #{tpu_custom_call.1} parent=1 // pred_region
      %s14 = ssub.s32 128, 128
      %15 = vsyncadd [#allocation3], %s14
      %s17 = sshll.u32 [#allocation2], 4
      %s18 = int_to_ptr.vmem [resolvable:$true] %s17
      %20 = dma.hbm_to_vmem [thread:$0]  %s0, 128, %s18, [#allocation3]
    $region5: #{tpu_custom_call.1} parent=1 // pred_fallthru
      _
    // Predicated region
    $region6: #{tpu_custom_call.1} parent=1 // pred_check
      _
    $region7: #{tpu_custom_call.1} parent=1 // pred_check_branch
      %22 = sbr.rel (0) target = $region9
    $region8: #{tpu_custom_call.1} parent=1 // pred_region
      %s24 = ssub.s32 512, 512
      %25 = vsyncadd [#allocation6], %s24
      %s26 = sshll.u32 [#allocation5], 4
      %s27 = int_to_ptr.vmem [resolvable:$true] %s26
      %32 = dma.hbm_to_vmem [thread:$0]  %s1, 512, %s27, [#allocation6], 128, 128, 8
    $region9: #{tpu_custom_call.1} parent=1 // pred_fallthru
      _
    // Predicated region
    $region10: #{tpu_custom_call.1} parent=1 // pred_check
      _
    $region11: #{tpu_custom_call.1} parent=1 // pred_check_branch
      %34 = sbr.rel (0) target = $region13
    $region12: #{tpu_custom_call.1} parent=1 // pred_region
      _
    $region13: #{tpu_custom_call.1} parent=1 // pred_fallthru
      _
    // Predicated region
    $region14: #{tpu_custom_call.1} parent=1 // pred_check
      _
    $region15: #{tpu_custom_call.1} parent=1 // pred_check_branch
      %36 = sbr.rel (0) target = $region17
    $region16: #{tpu_custom_call.1} parent=1 // pred_region
      %37 = dma.done [#allocation3], 128
    $region17: #{tpu_custom_call.1} parent=1 // pred_fallthru
      _
    // Predicated region
    $region18: #{tpu_custom_call.1} parent=1 // pred_check
      _
    $region19: #{tpu_custom_call.1} parent=1 // pred_check_branch
      %39 = sbr.rel (0) target = $region21
    $region20: #{tpu_custom_call.1} parent=1 // pred_region
      %40 = dma.done [#allocation6], 512
    $region21: #{tpu_custom_call.1} parent=1 // pred_fallthru
      _
    %v41 = vld [vmem:[#allocation2] sm:$0xff]
    %v42 = vld [vmem:[#allocation5] sm:$0xff]
    %v43 = vld [vmem:[#allocation5 + $0x8] sm:$0xff]
    %v44 = vld [vmem:[#allocation5 + $0x10] sm:$0xff]
    %v45 = vld [vmem:[#allocation5 + $0x18] sm:$0xff]
    %v46 = vld [vmem:[%s2] sm:$0x1]
    %v48 = vlaneseq
    %v49 = vshrl.u32 %v48, 7
    %v50 = vsub.s32 0, %v49
    %v51 = vrot.slane %v46, %v50
    %vm53 = vcmask 261120
    %v55 = vsel %vm53, %v41, 0
    %57 = vmatprep.subr.mxu0 0.0
    %58 = vmatpush1.msra.mxu0 %v42
    %59 = vmatprep.subr.mxu0 0.0
    %60 = vmatpush1.msra.mxu0 %v43
    %61 = vmatprep.subr.mxu0 0.0
    %62 = vmatpush1.msra.mxu0 %v44
    %63 = vmatprep.subr.mxu0 0.0
    %64 = vmatpush1.msra.mxu0 %v45
    %65 = vmatprep.subr.mxu0 0.0
    %66 = vmatpush1.msra.mxu0 0.0
    %67 = vmatprep.subr.mxu0 0.0
    %68 = vmatpush1.msra.mxu0 0.0
    %69 = vmatprep.subr.mxu0 0.0
    %70 = vmatpush1.msra.mxu0 0.0
    %71 = vmatprep.subr.mxu0 0.0
    %72 = vmatpush1.msra.mxu0 0.0
    %73 = vmatprep.subr.mxu0 0.0
    %74 = vmatpush1.msra.mxu0 0.0
    %75 = vmatprep.subr.mxu0 0.0
    %76 = vmatpush1.msra.mxu0 0.0
    %77 = vmatprep.subr.mxu0 0.0
    %78 = vmatpush1.msra.mxu0 0.0
    %79 = vmatprep.subr.mxu0 0.0
    %80 = vmatpush1.msra.mxu0 0.0
    %81 = vmatprep.subr.mxu0 0.0
    %82 = vmatpush1.msra.mxu0 0.0
    %83 = vmatprep.subr.mxu0 0.0
    %84 = vmatpush1.msra.mxu0 0.0
    %85 = vmatprep.subr.mxu0 0.0
    %86 = vmatpush1.msra.mxu0 0.0
    %87 = vmatprep.subr.mxu0 0.0
    %88 = vmatpush1.msra.mxu0 0.0
    %89 = vmatprep.subr.mxu0 0.0
    %90 = vmatpush1.msra.mxu0 0.0
    %91 = vmatprep.subr.mxu0 0.0
    %92 = vmatpush1.msra.mxu0 0.0
    %93 = vmatprep.subr.mxu0 0.0
    %94 = vmatpush1.msra.mxu0 0.0
    %95 = vmatprep.subr.mxu0 0.0
    %96 = vmatpush1.msra.mxu0 0.0
    %97 = vmatprep.subr.mxu0 0.0
    %98 = vmatpush1.msra.mxu0 0.0
    %99 = vmatprep.subr.mxu0 0.0
    %100 = vmatpush1.msra.mxu0 0.0
    %101 = vmatprep.subr.mxu0 0.0
    %102 = vmatpush1.msra.mxu0 0.0
    %103 = vmatprep.subr.mxu0 0.0
    %104 = vmatpush1.msra.mxu0 0.0
    %105 = vmatprep.subr.mxu0 0.0
    %106 = vmatpush1.msra.mxu0 0.0
    %107 = vmatprep.subr.mxu0 0.0
    %108 = vmatpush1.msra.mxu0 0.0
    %109 = vmatprep.subr.mxu0 0.0
    %110 = vmatpush1.msra.mxu0 0.0
    %111 = vmatprep.subr.mxu0 0.0
    %112 = vmatpush1.msra.mxu0 0.0
    %113 = vmatprep.subr.mxu0 0.0
    %114 = vmatpush1.msra.mxu0 0.0
    %115 = vmatprep.subr.mxu0 0.0
    %116 = vmatpush1.msra.mxu0 0.0
    %117 = vmatprep.subr.mxu0 0.0
    %118 = vmatpush1.msra.mxu0 0.0
    %119 = vmatprep.subr.mxu0 0.0
    %120 = vmatpush1.msra.mxu0 0.0
    %121 = vmatprep.mubr.f32.mxu0 0.0
    %122 = vmatmul.mubr.f32.gmra.mrb[0].mxu0 %v55
    %v123 = vpop.f32.mrb[0].mxu0
    %v124 = vadd.f32 %v51, %v123
    %v125 = vpop.f32.mrb[0].mxu0
    %126 = vdwg.mxu0
    %127 = vst [vmem:[#allocation7] sm:$0xff] %v124
    // Predicated region
    $region22: #{tpu_custom_call.1} parent=1 // pred_check
      _
    $region23: #{tpu_custom_call.1} parent=1 // pred_check_branch
      %129 = sbr.rel (0) target = $region25
    $region24: #{tpu_custom_call.1} parent=1 // pred_region
      %s131 = ssub.s32 128, 128
      %132 = vsyncadd [#allocation4], %s131
      %s134 = sshll.u32 [#allocation7], 4
      %s135 = int_to_ptr.vmem [resolvable:$true] %s134
      %137 = dma.vmem_to_hbm [thread:$0]  %s135, 128, %s3, [#allocation4]
    $region25: #{tpu_custom_call.1} parent=1 // pred_fallthru
      _
    // Predicated region
    $region26: #{tpu_custom_call.1} parent=1 // pred_check
      _
    $region27: #{tpu_custom_call.1} parent=1 // pred_check_branch
      %139 = sbr.rel (0) target = $region29
    $region28: #{tpu_custom_call.1} parent=1 // pred_region
      %140 = dma.done [#allocation4], 128
    $region29: #{tpu_custom_call.1} parent=1 // pred_fallthru
      _
    %141 = vsyncpa [#allocation3], 1
    %142 = vsyncpa [#allocation6], 1
    %143 = vsyncpa [#allocation4], 1

</llo_original>
